<compile_context>
chip_gen: v5e
topology: v5e:2x2
jax: 0.10.0
libtpu: 0.0.40
codegen_flags: <defaults>
</compile_context>

<pallas_src>
import functools

import jax
import jax.numpy as jnp
from jax.experimental import pallas as pl
from jax.experimental.pallas import tpu as pltpu


def _replication_pad1d_kernel(x_ref, o_ref, *, length, pad_right):
    # x_ref: (TILE_R, L); o_ref: (TILE_R, L + pad_right).  Rows = flattened B*C.
    x = x_ref[...]
    # Bulk copy: store the input region directly (no concat temp).
    o_ref[:, :length] = x
    # Replicate the last lane into the pad region.
    last = x[:, length - 1:length]                              # (TILE_R, 1)
    o_ref[:, length:] = jnp.broadcast_to(last, (x.shape[0], pad_right))


def _tpu_budgets():
    """Return (per-tile in+out byte budget, scoped VMEM limit) per generation."""
    cap = None
    try:
        cap = getattr(pltpu.get_tpu_info(), "vmem_capacity_bytes", None)
    except Exception:  # query unavailable -> assume the common 128 MiB parts
        cap = None
    if cap is not None and cap <= (64 << 20):
        # v7x-class: 64 MiB VMEM per TensorCore -> keep 2x(in+out) well under half.
        return 6 << 20, 40 << 20
    # v5e / v6e: 128 MiB VMEM -> bigger tiles amortize the ~0.35 us/step overhead.
    return 12 << 20, 64 << 20


def _choose_tile_r(rows, L, out_L, itemsize, sublane, target_bytes):
    """Largest row tile (multiple of `sublane`) with one in+out tile under budget."""
    if rows <= sublane:
        return rows                               # full-dim block is always legal
    per_row = (L + out_L) * itemsize
    max_tr = (target_bytes // max(per_row, 1)) // sublane * sublane
    max_tr = max(max_tr, sublane)                 # never below one sublane group
    rows_rounded = pl.cdiv(rows, sublane) * sublane
    return min(max_tr, rows_rounded)


def replication_pad1d(x: jax.Array, padding, *, tile_r: int | None = None) -> jax.Array:
    """Right-side replication padding along the last axis of a (B, C, L) array.

    Matches the given PyTorch module: only padding[-1] (right pad) is applied.
    """
    # TODO(synk): the reference module ignores left padding and never crops;
    # left / negative padding is intentionally not supported here.
    pad_right = int(padding[-1])
    if pad_right < 0:
        raise ValueError("Negative (cropping) padding is not supported.")

    B, C, L = x.shape
    if pad_right == 0:
        return x
    if L == 0:
        raise ValueError("Cannot replicate-pad an input with empty length axis.")

    out_L = L + pad_right
    rows = B * C
    itemsize = jnp.dtype(x.dtype).itemsize
    # Sublane granularity per dtype: 8 (f32), 16 (bf16), 32 (int8).
    sublane = max(8, 32 // max(itemsize, 1))

    target_bytes, vmem_cap = _tpu_budgets()
    if tile_r is None:
        tile_r = _choose_tile_r(rows, L, out_L, itemsize, sublane, target_bytes)
    grid = (pl.cdiv(rows, tile_r),)

    kernel = functools.partial(
        _replication_pad1d_kernel, length=L, pad_right=pad_right
    )

    # Double-buffered footprint: 2 x (in-tile + out-tile), plus headroom.
    tile_bytes = tile_r * (L + out_L) * itemsize
    vmem_limit = int(min(max(2 * tile_bytes + (4 << 20), 16 << 20), vmem_cap))

    x2 = x.reshape(rows, L)
    out2 = pl.pallas_call(
        kernel,
        out_shape=jax.ShapeDtypeStruct((rows, out_L), x.dtype),
        grid=grid,
        in_specs=[pl.BlockSpec((tile_r, L), lambda i: (i, 0))],
        out_specs=pl.BlockSpec((tile_r, out_L), lambda i: (i, 0)),
        compiler_params=pltpu.CompilerParams(
            dimension_semantics=("parallel",),
            vmem_limit_bytes=vmem_limit,
        ),
    )(x2)
    return out2.reshape(B, C, out_L)


def replication_pad1d_reference(x: jax.Array, padding) -> jax.Array:
    pad_right = int(padding[-1])
    last = x[:, :, -1:]
    rep = jnp.repeat(last, pad_right, axis=-1)
    return jnp.concatenate([x, rep], axis=-1)


if __name__ == "__main__":
    key = jax.random.PRNGKey(0)

    # Small test consistent with the module (rows = B*C = 8, single block).
    B, C, L = 2, 4, 16
    padding = (0, 8)  # (left, right) — module only uses padding[-1]
    x = jax.random.normal(key, (B, C, L), dtype=jnp.float32)

    out = jax.block_until_ready(replication_pad1d(x, padding))
    ref = replication_pad1d_reference(x, padding)
    assert out.shape == (B, C, L + padding[-1]), out.shape
    assert out.dtype == x.dtype
    assert jnp.allclose(out, ref), "Pallas output does not match reference (small)"

    # Ragged-rows test: rows = 15 is not a multiple of the forced tile (8),
    # exercising the cdiv grid + masked last block path.
    key2 = jax.random.PRNGKey(1)
    B2, C2, L2 = 3, 5, 96
    padding2 = (0, 16)
    x2 = jax.random.normal(key2, (B2, C2, L2), dtype=jnp.float32)

    out2 = jax.block_until_ready(replication_pad1d(x2, padding2, tile_r=8))
    ref2 = replication_pad1d_reference(x2, padding2)
    assert out2.shape == (B2, C2, L2 + padding2[-1]), out2.shape
    assert jnp.allclose(out2, ref2), "Pallas output does not match reference (ragged)"

    # bf16 test (rows smaller than the bf16 sublane group -> full-dim block).
    key3 = jax.random.PRNGKey(2)
    B3, C3, L3 = 2, 4, 32
    padding3 = (0, 8)
    x3 = jax.random.normal(key3, (B3, C3, L3), dtype=jnp.bfloat16)

    out3 = jax.block_until_ready(replication_pad1d(x3, padding3))
    ref3 = replication_pad1d_reference(x3, padding3)
    assert out3.shape == (B3, C3, L3 + padding3[-1]), out3.shape
    assert out3.dtype == jnp.bfloat16
    assert jnp.array_equal(out3, ref3), "Pallas output does not match reference (bf16)"

    print("KERNEL_OK")
</pallas_src>

<mosaic_0001>
module attributes {stable_mosaic.version = 11 : i64} {
  func.func @_replication_pad1d_kernel(%arg0: i32, %arg1: memref<8x16xf32, #tpu.memory_space<vmem>>, %arg2: memref<8x24xf32, #tpu.memory_space<vmem>>) attributes {dimension_semantics = [#tpu.dimension_semantics<parallel>], iteration_bounds = array<i64: 1>, scalar_prefetch = 0 : i64, scratch_operands = 0 : i64, tpu.core_type = #tpu.core_type<tc>, window_params = [{transform_indices = @transform_0, window_bounds = array<i64: 8, 16>}, {transform_indices = @transform_1, window_bounds = array<i64: 8, 24>}]} {
    %c0 = arith.constant 0 : index
    %c0_0 = arith.constant 0 : index
    %0 = vector.load %arg1[%c0, %c0_0] : memref<8x16xf32, #tpu.memory_space<vmem>>, vector<8x16xf32>
    %c0_1 = arith.constant 0 : index
    %c0_2 = arith.constant 0 : index
    %1 = vector.load %arg2[%c0_1, %c0_2] : memref<8x24xf32, #tpu.memory_space<vmem>>, vector<8x16xf32>
    tpu.vector_store %arg2[%c0_1, %c0_2], %0 {strides = array<i32>} : memref<8x24xf32, #tpu.memory_space<vmem>>, vector<8x16xf32>,
    %2 = vector.extract_strided_slice %0 {offsets = [0, 15], sizes = [8, 1], strides = [1, 1]} : vector<8x16xf32> to vector<8x1xf32>
    %3 = vector.shape_cast %2 : vector<8x1xf32> to vector<8x1xf32>
    %4 = vector.broadcast %3 : vector<8x1xf32> to vector<8x8xf32>
    %c0_3 = arith.constant 0 : index
    %c16 = arith.constant 16 : index
    %5 = vector.load %arg2[%c0_3, %c16] : memref<8x24xf32, #tpu.memory_space<vmem>>, vector<8x8xf32>
    tpu.vector_store %arg2[%c0_3, %c16], %4 {strides = array<i32>} : memref<8x24xf32, #tpu.memory_space<vmem>>, vector<8x8xf32>,
    return
  }
  func.func @transform_0(%arg0: i32) -> (i32, i32) {
    %c0_i32 = arith.constant 0 : i32
    %c0_i32_0 = arith.constant 0 : i32
    return %arg0, %c0_i32 : i32, i32
  }
  func.func @transform_1(%arg0: i32) -> (i32, i32) {
    %c0_i32 = arith.constant 0 : i32
    %c0_i32_0 = arith.constant 0 : i32
    return %arg0, %c0_i32 : i32, i32
  }
}

</mosaic_0001>

<llo_original>
// kernel: tpu_custom_call.1
$region0: #{tpu_custom_call.1}
  #allocation0 [shape = 'u32[]', space=smem, size = 0x4, offset = 0x4, fixed_abs, tag = 'smem constant byte address 0x4 - core index']
  #allocation1 [shape = 'u32[72,128]{1,0:T(1,128)}', space=vmem, size = 0x9000, scoped, tag = 'internal scratch']
  %s0 = inlined_call_operand.hbm [shape: f32[8,16], index: 0, kind: input, shape index: {}]
  %s1 = inlined_call_operand.hbm [shape: f32[8,24], index: 1, kind: output, shape index: {}]
  %s2 = sld [smem:[#allocation0]]
  $region18: #{tpu_custom_call.1} parent=0
    _
  %s4 = ssub.s32 1, %s2
  %s5 = scalar_select 0, %s4, %s2
  $region1: #{tpu_custom_call.1} parent=0
    #allocation2 [shape = 'u8[4096]{0}', space=vmem, size = 0x1000, scoped, tag = 'input window, operand 0, single buffered']
    #allocation3 [shape = 's32[1]{0}', space=sflag, size = 0x4, scoped, tag = 'scoped memory for tpu_custom_call.1']
    #allocation4 [shape = 's32[1]{0}', space=sflag, size = 0x4, scoped, tag = 'scoped memory for tpu_custom_call.1']
    #allocation5 [shape = 'u8[4096]{0}', space=vmem, size = 0x1000, scoped, tag = 'output window, operand 0, single buffered']
    %6 = vsyncpa [#allocation3], 0
    %7 = vsyncpa [#allocation4], 0
    // Predicated region
    $region2: #{tpu_custom_call.1} parent=1 // pred_check
      _
    $region3: #{tpu_custom_call.1} parent=1 // pred_check_branch
      %9 = sbr.rel (0) target = $region5
    $region4: #{tpu_custom_call.1} parent=1 // pred_region
      %11 = vsyncadd [#allocation3], 0
      %s13 = sshll.u32 %s0, 4
      %s14 = int_to_ptr.hbm [resolvable:$true] %s13
      %s15 = sshll.u32 [#allocation2], 4
      %s16 = int_to_ptr.vmem [resolvable:$true] %s15
      %18 = dma.hbm_to_vmem [thread:$0]  %s14, 128, %s16, [#allocation3]
    $region5: #{tpu_custom_call.1} parent=1 // pred_fallthru
      _
    // Predicated region
    $region6: #{tpu_custom_call.1} parent=1 // pred_check
      _
    $region7: #{tpu_custom_call.1} parent=1 // pred_check_branch
      %20 = sbr.rel (0) target = $region9
    $region8: #{tpu_custom_call.1} parent=1 // pred_region
      %22 = dma.done [#allocation3], 128
    $region9: #{tpu_custom_call.1} parent=1 // pred_fallthru
      _
    %v23 = vld [vmem:[#allocation2] sm:$0xff]
    %vm24 = vcmask 130048
    %25 = vst.msk [vmem:[#allocation5] sm:$0xff] %vm24, %v23
    %27 = vset.pattern.permute.xlu0 15
    %28 = vperm.xlu0 %27, %v23
    %v29 = vpop.permute.xlu0 %28
    %vm31 = vcmask 195712
    %32 = vst.msk [vmem:[#allocation5] sm:$0xff] %vm31, %v29
    // Predicated region
    $region10: #{tpu_custom_call.1} parent=1 // pred_check
      _
    $region11: #{tpu_custom_call.1} parent=1 // pred_check_branch
      %34 = sbr.rel (0) target = $region13
    $region12: #{tpu_custom_call.1} parent=1 // pred_region
      %36 = vsyncadd [#allocation4], 0
      %s38 = sshll.u32 [#allocation5], 4
      %s39 = int_to_ptr.vmem [resolvable:$true] %s38
      %s40 = sshll.u32 %s1, 4
      %s41 = int_to_ptr.hbm [resolvable:$true] %s40
      %43 = dma.vmem_to_hbm [thread:$0]  %s39, 128, %s41, [#allocation4]
    $region13: #{tpu_custom_call.1} parent=1 // pred_fallthru
      _
    // Predicated region
    $region14: #{tpu_custom_call.1} parent=1 // pred_check
      _
    $region15: #{tpu_custom_call.1} parent=1 // pred_check_branch
      %45 = sbr.rel (0) target = $region17
    $region16: #{tpu_custom_call.1} parent=1 // pred_region
      %47 = dma.done [#allocation4], 128
    $region17: #{tpu_custom_call.1} parent=1 // pred_fallthru
      _
    %48 = vsyncpa [#allocation3], 1
    %49 = vsyncpa [#allocation4], 1

</llo_original>
